<compile_context>
chip_gen: v7x
topology: tpu7x:2x2x1
jax: 0.10.0
libtpu: 0.0.40
codegen_flags: <defaults>
</compile_context>

<pallas_src>
import math

import jax
import jax.numpy as jnp
from jax.experimental import pallas as pl
from jax.experimental.pallas import tpu as pltpu

_LANE = 128
_SUBLANE = 8
# Per-block row cap: 4096 rows * 128 lanes * 4 B = 2 MiB per buffer; with double
# buffering of input+output this stays far under every generation's VMEM budget.
_ROW_CAP = 4096


def _identity_copy_kernel(x_ref, o_ref):
    o_ref[...] = x_ref[...]


def _pick_row_tile(rows):
    """Largest power-of-two multiple of 8 that divides `rows`, capped by _ROW_CAP."""
    tm = _SUBLANE
    m = _SUBLANE
    while m <= min(rows, _ROW_CAP):
        if rows % m == 0:
            tm = m
        m *= 2
    return tm


def pallas_identity(x):
    """Identity forward pass: returns a copy of x computed by a Pallas TPU kernel."""
    orig_shape = x.shape
    dtype = x.dtype
    total = int(math.prod(orig_shape)) if x.ndim > 0 else 1

    flat = x.reshape(-1)

    if total % (_LANE * _SUBLANE) == 0 and total > 0:
        # Lane-dense 2-D view; reshape of a contiguous array is metadata-only.
        rows = total // _LANE
        x2 = flat.reshape(rows, _LANE)
        tm = _pick_row_tile(rows)
        grid = (rows // tm,)
        out = pl.pallas_call(
            _identity_copy_kernel,
            out_shape=jax.ShapeDtypeStruct((rows, _LANE), dtype),
            grid=grid,
            in_specs=[pl.BlockSpec((tm, _LANE), lambda i: (i, 0))],
            out_specs=pl.BlockSpec((tm, _LANE), lambda i: (i, 0)),
            compiler_params=pltpu.CompilerParams(
                dimension_semantics=("parallel",)),
        )(x2)
        return out.reshape(orig_shape)

    # Fallback for shapes whose flat size is not a multiple of 8*128: single whole-array
    # block (block_shape == full array dims bypasses the (8,128) divisibility rule).
    # Only used for tiny/odd shapes, so the lack of tiling is irrelevant.
    x2 = flat.reshape(1, max(total, 1))
    out = pl.pallas_call(
        _identity_copy_kernel,
        out_shape=jax.ShapeDtypeStruct(x2.shape, dtype),
    )(x2)
    return out.reshape(orig_shape)


if __name__ == "__main__":
    key = jax.random.PRNGKey(0)
    k1, k2 = jax.random.split(key)

    # Primary test: small NCHW-like input, matches the module's "any tensor" contract.
    x = jax.random.normal(k1, (2, 4, 16, 16), jnp.float32)
    fwd = jax.jit(pallas_identity)
    y = fwd(x)
    jax.block_until_ready(y)
    assert y.shape == x.shape and y.dtype == x.dtype
    assert bool(jnp.all(y == x)), "identity output mismatch"

    # Secondary test: larger input that exercises the multi-step (grid > 1) tiled path.
    x2 = jax.random.normal(k2, (8, 8, 32, 128), jnp.float32)  # 2048 rows -> grid=(2,)
    y2 = fwd(x2)
    jax.block_until_ready(y2)
    assert bool(jnp.all(y2 == x2)), "identity output mismatch (tiled path)"

    print("KERNEL_OK")
</pallas_src>

<mosaic_0001>
module attributes {stable_mosaic.version = 11 : i64} {
  func.func @_identity_copy_kernel(%arg0: i32, %arg1: memref<16x128xf32, #tpu.memory_space<vmem>>, %arg2: memref<16x128xf32, #tpu.memory_space<vmem>>) attributes {dimension_semantics = [#tpu.dimension_semantics<parallel>], iteration_bounds = array<i64: 1>, scalar_prefetch = 0 : i64, scratch_operands = 0 : i64, tpu.core_type = #tpu.core_type<tc>, window_params = [{transform_indices = @transform_0, window_bounds = array<i64: 16, 128>}, {transform_indices = @transform_1, window_bounds = array<i64: 16, 128>}]} {
    %c0 = arith.constant 0 : index
    %c0_0 = arith.constant 0 : index
    %0 = vector.load %arg1[%c0, %c0_0] : memref<16x128xf32, #tpu.memory_space<vmem>>, vector<16x128xf32>
    %c0_1 = arith.constant 0 : index
    %c0_2 = arith.constant 0 : index
    %1 = vector.load %arg2[%c0_1, %c0_2] : memref<16x128xf32, #tpu.memory_space<vmem>>, vector<16x128xf32>
    tpu.vector_store %arg2[%c0_1, %c0_2], %0 {strides = array<i32>} : memref<16x128xf32, #tpu.memory_space<vmem>>, vector<16x128xf32>,
    return
  }
  func.func @transform_0(%arg0: i32) -> (i32, i32) {
    %c0_i32 = arith.constant 0 : i32
    %c0_i32_0 = arith.constant 0 : i32
    return %arg0, %c0_i32 : i32, i32
  }
  func.func @transform_1(%arg0: i32) -> (i32, i32) {
    %c0_i32 = arith.constant 0 : i32
    %c0_i32_0 = arith.constant 0 : i32
    return %arg0, %c0_i32 : i32, i32
  }
}

</mosaic_0001>

<llo_original>
// kernel: pallas_identity.1
$region0: #{pallas_identity.1}
  #allocation0 [shape = 'u32[]', space=smem, size = 0x4, offset = 0x4, fixed_abs, tag = 'smem constant byte address 0x4 - core index']
  #allocation1 [shape = 'u32[144,128]{1,0:T(1,128)}', space=vmem, size = 0x12000, scoped, tag = 'internal scratch']
  %s0 = inlined_call_operand.vmem [shape: f32[16,128], index: 0, kind: input, shape index: {}]
  %s1 = inlined_call_operand.vmem [shape: f32[16,128], index: 1, kind: output, shape index: {}]
  %s2 = sld [smem:[#allocation0]]
  $region14: #{pallas_identity.1} parent=0
    _
  %s4 = ssub.s32 1, %s2
  %s5 = scalar_select 0, %s4, %s2
  // Predicated region
  $region2: #{pallas_identity.1} parent=0 // pred_check
    _
  $region3: #{pallas_identity.1} parent=0 // pred_check_branch
    %7 = sbr.rel (0) target = $region5
  $region4: #{pallas_identity.1} parent=0 // pred_region
    _
  $region5: #{pallas_identity.1} parent=0 // pred_fallthru
    _
  %v8 = vld [vmem:[%s0] sm:$0xff]
  %v9 = vld [vmem:[%s0 + $0x8] sm:$0xff]
  %10 = vst [vmem:[%s1] sm:$0xff] %v8
  %11 = vst [vmem:[%s1 + $0x8] sm:$0xff] %v9
  // Predicated region
  $region6: #{pallas_identity.1} parent=0 // pred_check
    _
  $region7: #{pallas_identity.1} parent=0 // pred_check_branch
    %13 = sbr.rel (0) target = $region9
  $region8: #{pallas_identity.1} parent=0 // pred_region
    _
  $region9: #{pallas_identity.1} parent=0 // pred_fallthru
    _
  // Predicated region
  $region10: #{pallas_identity.1} parent=0 // pred_check
    _
  $region11: #{pallas_identity.1} parent=0 // pred_check_branch
    %15 = sbr.rel (0) target = $region13
  $region12: #{pallas_identity.1} parent=0 // pred_region
    _
  $region13: #{pallas_identity.1} parent=0 // pred_fallthru
    _

</llo_original>
